<compile_context>
chip_gen: v7x
topology: tpu7x:2x2x1
jax: 0.10.0
libtpu: 0.0.40
codegen_flags: <defaults>
</compile_context>

<pallas_src>
import functools

import jax
import jax.numpy as jnp
from jax.experimental import pallas as pl
from jax.experimental.pallas import tpu as pltpu


_LANE = 128
_BLOCK_BYTES = 4 * 1024 * 1024  # ~4 MiB blocks: amortizes ~0.35us/step overhead


def _copy_kernel(x_ref, o_ref):
    # Identity pass-through; derived wrappers replace this body with compute.
    o_ref[...] = x_ref[...]


def _sublane_multiple(dtype) -> int:
    # Sub-32-bit dtypes pack along sublanes: f32 -> 8 rows/vreg, bf16 -> 16,
    # int8 -> 32.  Keep block rows a multiple of this for full-width ld/st.
    itemsize = jnp.dtype(dtype).itemsize
    return max(8, 32 // max(itemsize, 1))


def _choose_lanes(n_aligned: int, sub: int) -> int:
    # Widest lane count (multiple of 128) dividing the aligned prefix while
    # still leaving at least `sub` full sublane rows; fall back to widest.
    for c in (2048, 1024, 512, 256, 128):
        if n_aligned % c == 0 and n_aligned // c >= sub:
            return c
    for c in (2048, 1024, 512, 256, 128):
        if n_aligned % c == 0:
            return c
    return _LANE


def _choose_tile_rows(rows: int, lanes: int, itemsize: int, sub: int) -> int:
    tile = _BLOCK_BYTES // (lanes * itemsize)
    tile = max(sub, (tile // sub) * sub)
    if tile * 2 > rows:
        # Prefer >= 2 blocks so the grid can shard across v7x's 2 TensorCores.
        half = (rows // 2 // sub) * sub
        tile = half if half >= sub else rows  # full-extent block if too small
    return min(tile, rows)


def _vmem_limit_bytes() -> int:
    # Explicit scoped-VMEM limit with headroom: ~48 MiB on 128-MiB chips
    # (v5e/v6e), ~32 MiB on 64-MiB v7x.  4 MiB blocks double-buffered on two
    # arrays need only ~16 MiB.
    try:
        phys = int(pltpu.get_tpu_info().vmem_capacity_bytes)
    except Exception:
        phys = 64 << 20  # conservative (v7x-sized) fallback
    return min(48 << 20, phys // 2)


def _identity_copy_2d(x2d: jnp.ndarray) -> jnp.ndarray:
    """Copy a lane-dense 2-D (rows, lanes) array through a Pallas kernel."""
    rows, lanes = x2d.shape
    itemsize = jnp.dtype(x2d.dtype).itemsize
    sub = _sublane_multiple(x2d.dtype)
    tile_rows = _choose_tile_rows(rows, lanes, itemsize, sub)
    grid = (pl.cdiv(rows, tile_rows),)

    return pl.pallas_call(
        _copy_kernel,
        out_shape=jax.ShapeDtypeStruct((rows, lanes), x2d.dtype),
        grid_spec=pltpu.PrefetchScalarGridSpec(
            num_scalar_prefetch=0,
            grid=grid,
            in_specs=[pl.BlockSpec((tile_rows, lanes), lambda i: (i, 0))],
            out_specs=pl.BlockSpec((tile_rows, lanes), lambda i: (i, 0)),
        ),
        compiler_params=pltpu.CompilerParams(
            dimension_semantics=("parallel",),
            vmem_limit_bytes=_vmem_limit_bytes(),
        ),
    )(x2d)


@jax.jit
def _forward_jit(x: jnp.ndarray) -> jnp.ndarray:
    # Whole path under one jit: reshapes are bitcasts, single dispatch.
    shape = x.shape
    flat = x.reshape(-1)
    total = flat.shape[0]
    n_aligned = (total // _LANE) * _LANE  # static at trace time

    if n_aligned == 0:
        # Tensor too small for a (8,128)-legal block; identity short-circuit.
        return x

    sub = _sublane_multiple(x.dtype)
    lanes = _choose_lanes(n_aligned, sub)
    rows = n_aligned // lanes

    head = flat[:n_aligned].reshape(rows, lanes)
    y_head = _identity_copy_2d(head).reshape(-1)

    if n_aligned == total:
        return y_head.reshape(shape)

    # <=127-element tail: identity, so pass it through untouched (no full-array
    # pad / un-pad slice, no extra HBM passes).
    tail = flat[n_aligned:]
    return jnp.concatenate([y_head, tail]).reshape(shape)


# ----------------------------------------------------------------------------
# JAX-side wrapper mirroring the PyTorch BaseWrapper module.
# ----------------------------------------------------------------------------
class BaseWrapper:
    def __init__(self, frame_rate: int, is_target: bool = False):
        # Deterministic, non-trainable "parameters" (buffers), as in
        # nn.Parameter(requires_grad=False).
        self.frame_rate = jnp.asarray(frame_rate, dtype=jnp.int32)
        self.is_target = jnp.asarray(is_target, dtype=jnp.bool_)
        self.force_cpu = False

    def forward(self, x: jnp.ndarray) -> jnp.ndarray:
        # Base class has no defined forward (raises NotImplementedError in
        # PyTorch); identity pass-through is the Pallas scaffold for derived
        # classes.  Any input shape/dtype is accepted.
        return _forward_jit(x)

    def __call__(self, x):
        return self.forward(x)


if __name__ == "__main__":
    key = jax.random.PRNGKey(0)
    module = BaseWrapper(frame_rate=16000, is_target=False)

    # Main case: NCHW tensor, 128-aligned flat size -> pure kernel path.
    x = jax.random.normal(key, (2, 4, 16, 16), dtype=jnp.float32)
    y = jax.block_until_ready(module(x))
    assert y.shape == x.shape and y.dtype == x.dtype
    assert bool(jnp.allclose(y, x))

    # Secondary case: non-128-multiple flat size -> aligned prefix through the
    # kernel, tiny tail passed through (exercises the no-pad path).
    x2 = jax.random.normal(jax.random.PRNGKey(0), (5, 5, 17), dtype=jnp.float32)
    y2 = jax.block_until_ready(module(x2))
    assert y2.shape == x2.shape and bool(jnp.allclose(y2, x2))

    assert int(module.frame_rate) == 16000
    assert bool(module.is_target) is False

    print("KERNEL_OK")
</pallas_src>

<mosaic_0001>
module attributes {stable_mosaic.version = 11 : i64} {
  func.func @_copy_kernel(%arg0: i32, %arg1: memref<8x256xf32, #tpu.memory_space<vmem>>, %arg2: memref<8x256xf32, #tpu.memory_space<vmem>>) attributes {dimension_semantics = [#tpu.dimension_semantics<parallel>], iteration_bounds = array<i64: 1>, scalar_prefetch = 0 : i64, scratch_operands = 0 : i64, tpu.core_type = #tpu.core_type<tc>, window_params = [{transform_indices = @transform_0, window_bounds = array<i64: 8, 256>}, {transform_indices = @transform_1, window_bounds = array<i64: 8, 256>}]} {
    %c0 = arith.constant 0 : index
    %c0_0 = arith.constant 0 : index
    %0 = vector.load %arg1[%c0, %c0_0] : memref<8x256xf32, #tpu.memory_space<vmem>>, vector<8x256xf32>
    %c0_1 = arith.constant 0 : index
    %c0_2 = arith.constant 0 : index
    %1 = vector.load %arg2[%c0_1, %c0_2] : memref<8x256xf32, #tpu.memory_space<vmem>>, vector<8x256xf32>
    tpu.vector_store %arg2[%c0_1, %c0_2], %0 {strides = array<i32>} : memref<8x256xf32, #tpu.memory_space<vmem>>, vector<8x256xf32>,
    return
  }
  func.func @transform_0(%arg0: i32) -> (i32, i32) {
    %c0_i32 = arith.constant 0 : i32
    %c0_i32_0 = arith.constant 0 : i32
    return %arg0, %c0_i32 : i32, i32
  }
  func.func @transform_1(%arg0: i32) -> (i32, i32) {
    %c0_i32 = arith.constant 0 : i32
    %c0_i32_0 = arith.constant 0 : i32
    return %arg0, %c0_i32 : i32, i32
  }
}

</mosaic_0001>

<llo_original>
// kernel: _forward_jit.1
$region0: #{_forward_jit.1}
  #allocation0 [shape = 'u32[]', space=smem, size = 0x4, offset = 0x4, fixed_abs, tag = 'smem constant byte address 0x4 - core index']
  #allocation1 [shape = 'u32[144,128]{1,0:T(1,128)}', space=vmem, size = 0x12000, scoped, tag = 'internal scratch']
  %s0 = inlined_call_operand.vmem [shape: f32[8,256], index: 0, kind: input, shape index: {}]
  %s1 = inlined_call_operand.vmem [shape: f32[8,256], index: 1, kind: output, shape index: {}]
  %s2 = sld [smem:[#allocation0]]
  $region14: #{_forward_jit.1} parent=0
    _
  %s4 = ssub.s32 1, %s2
  %s5 = scalar_select 0, %s4, %s2
  // Predicated region
  $region2: #{_forward_jit.1} parent=0 // pred_check
    _
  $region3: #{_forward_jit.1} parent=0 // pred_check_branch
    %7 = sbr.rel (0) target = $region5
  $region4: #{_forward_jit.1} parent=0 // pred_region
    _
  $region5: #{_forward_jit.1} parent=0 // pred_fallthru
    _
  %v8 = vld [vmem:[%s0] sm:$0xff]
  %v9 = vld [vmem:[%s0 + $0x8] sm:$0xff]
  %10 = vst [vmem:[%s1] sm:$0xff] %v8
  %11 = vst [vmem:[%s1 + $0x8] sm:$0xff] %v9
  // Predicated region
  $region6: #{_forward_jit.1} parent=0 // pred_check
    _
  $region7: #{_forward_jit.1} parent=0 // pred_check_branch
    %13 = sbr.rel (0) target = $region9
  $region8: #{_forward_jit.1} parent=0 // pred_region
    _
  $region9: #{_forward_jit.1} parent=0 // pred_fallthru
    _
  // Predicated region
  $region10: #{_forward_jit.1} parent=0 // pred_check
    _
  $region11: #{_forward_jit.1} parent=0 // pred_check_branch
    %15 = sbr.rel (0) target = $region13
  $region12: #{_forward_jit.1} parent=0 // pred_region
    _
  $region13: #{_forward_jit.1} parent=0 // pred_fallthru
    _

</llo_original>
